<compile_context>
chip_gen: v7x
topology: tpu7x:2x2x1
jax: 0.10.0
libtpu: 0.0.40
codegen_flags: <defaults>
</compile_context>

<pallas_src>
import functools

import jax
import jax.numpy as jnp
from jax import lax
from jax.experimental import pallas as pl
from jax.experimental.pallas import tpu as pltpu

LANES = 128            # vreg lane width (last dim)
SUBLANES = 8           # f32 sublane packing (second-to-last dim)
MAX_TILE_ROWS = 2048   # 2048 * 128 * 4 B = 1 MiB per f32 input per grid step


def _round_up(v, m):
    return (v + m - 1) // m * m


def _sublane_multiple(dtype):
    # f32 -> 8, bf16 -> 16, int8 -> 32 rows per packed vreg tile.
    return SUBLANES * max(1, 4 // jnp.dtype(dtype).itemsize)


def _bce_partial_kernel(x_ref, y_ref, o_ref, *, tile_rows, valid_rows, steps,
                        may_overhang):
    """Accumulates (8, 128) partial BCE sums for one parallel shard."""
    p = pl.program_id(0)   # parallel shard (megacore axis)
    s = pl.program_id(1)   # reduction step within the shard

    x = x_ref[...].astype(jnp.float32)
    y = y_ref[...].astype(jnp.float32)
    # Matches the PyTorch module exactly: -y*log(x) - (1-y)*log(1-x).
    loss = -y * jnp.log(x) - (1.0 - y) * jnp.log(1.0 - x)

    @pl.when(s == 0)
    def _():
        o_ref[...] = jnp.zeros_like(o_ref)

    def fold(v):
        # (tile_rows, 128) -> (8, 128): pure full-vreg VALU adds, no XLU.
        acc = v[0:SUBLANES]
        for k in range(1, tile_rows // SUBLANES):
            acc = acc + v[k * SUBLANES:(k + 1) * SUBLANES]
        return acc

    if may_overhang:
        block_start = (p * steps + s) * tile_rows
        is_full = block_start + tile_rows <= valid_rows

        @pl.when(is_full)
        def _():
            # Interior tiles: unmasked fast path.
            o_ref[...] += fold(loss)

        @pl.when(jnp.logical_not(is_full))
        def _():
            # Only the over-hanging block(s) pay for the row mask; garbage rows
            # (possibly NaN/inf) are discarded by the select.
            row = lax.broadcasted_iota(jnp.int32, loss.shape, 0)
            o_ref[...] += fold(jnp.where(row < valid_rows - block_start, loss, 0.0))
    else:
        o_ref[...] += fold(loss)


def bce_mean_pallas(x, y):
    """mean(-y*log(x) - (1-y)*log(1-x)) over all elements; x, y share any shape."""
    assert x.shape == y.shape
    total = int(x.size)
    if total == 0:
        return jnp.float32(jnp.nan)   # torch.mean of an empty tensor

    x_flat = x.reshape(-1)
    y_flat = y.reshape(-1)

    rows = pl.cdiv(total, LANES)
    pad = rows * LANES - total
    if pad:
        # Pad x with 0.5 / y with 0.0: each padded element contributes exactly
        # ln(2); subtracted once after the kernel (no per-tile masking for it).
        x_flat = jnp.pad(x_flat, (0, pad), constant_values=0.5)
        y_flat = jnp.pad(y_flat, (0, pad), constant_values=0.0)
    x2 = x_flat.reshape(rows, LANES)   # metadata-only reshape
    y2 = y_flat.reshape(rows, LANES)

    sub = max(_sublane_multiple(x.dtype), _sublane_multiple(y.dtype))
    tile_rows = min(MAX_TILE_ROWS, _round_up(rows, sub))
    num_blocks = pl.cdiv(rows, tile_rows)

    num_shards = 2 if num_blocks >= 2 else 1   # 2 TCs on v7x; serial loop elsewhere
    steps = pl.cdiv(num_blocks, num_shards)
    may_overhang = num_shards * steps * tile_rows > rows
    excess_blocks = num_shards * steps > num_blocks

    if excess_blocks:
        # Grid points past the last real block re-read it; their contribution
        # is fully masked to zero in-kernel.
        def in_map(p, s):
            return (jnp.minimum(p * steps + s, num_blocks - 1), 0)
    else:
        def in_map(p, s):
            return (p * steps + s, 0)

    kernel = functools.partial(
        _bce_partial_kernel, tile_rows=tile_rows, valid_rows=rows,
        steps=steps, may_overhang=may_overhang)

    partials = pl.pallas_call(
        kernel,
        out_shape=jax.ShapeDtypeStruct((num_shards, SUBLANES, LANES), jnp.float32),
        grid_spec=pltpu.PrefetchScalarGridSpec(
            num_scalar_prefetch=0,
            grid=(num_shards, steps),
            in_specs=[
                pl.BlockSpec((tile_rows, LANES), in_map),   # x tiles
                pl.BlockSpec((tile_rows, LANES), in_map),   # y tiles
            ],
            # Lane-dense (8, 128) per-shard accumulator, resident across `s`.
            out_specs=pl.BlockSpec((None, SUBLANES, LANES), lambda p, s: (p, 0, 0)),
        ),
        compiler_params=pltpu.CompilerParams(
            dimension_semantics=("parallel", "arbitrary")),
    )(x2, y2)

    pad_correction = jnp.float32(pad) * jnp.log(jnp.float32(2.0))
    return (jnp.sum(partials, dtype=jnp.float32) - pad_correction) / jnp.float32(total)


if __name__ == "__main__":
    key = jax.random.PRNGKey(0)
    k_logits, k_labels = jax.random.split(key)

    # Small multi-label setup consistent with the SGD.py context (103 classes).
    batch, num_classes = 8, 103
    logits = jax.random.normal(k_logits, (batch, num_classes), jnp.float32)
    x = jnp.clip(jax.nn.sigmoid(logits), 1e-6, 1.0 - 1e-6)  # predicted probabilities
    y = jax.random.bernoulli(k_labels, 0.3, (batch, num_classes)).astype(jnp.float32)

    loss = jax.block_until_ready(bce_mean_pallas(x, y))

    # Reference in plain JAX (same math as the PyTorch module).
    loss_ref = jnp.mean(-y * jnp.log(x) - (1.0 - y) * jnp.log(1.0 - x))
    assert loss.shape == ()
    assert jnp.allclose(loss, loss_ref, atol=1e-6, rtol=1e-5), (loss, loss_ref)

    print("KERNEL_OK")
</pallas_src>

<mosaic_0001>
module attributes {stable_mosaic.version = 11 : i64} {
  func.func @_bce_partial_kernel(%arg0: i32, %arg1: i32, %arg2: memref<8x128xf32, #tpu.memory_space<vmem>>, %arg3: memref<8x128xf32, #tpu.memory_space<vmem>>, %arg4: memref<1x8x128xf32, #tpu.memory_space<vmem>>) attributes {dimension_semantics = [#tpu.dimension_semantics<parallel>, #tpu.dimension_semantics<arbitrary>], iteration_bounds = array<i64: 1, 1>, scalar_prefetch = 0 : i64, scratch_operands = 0 : i64, tpu.core_type = #tpu.core_type<tc>, window_params = [{transform_indices = @transform_0, window_bounds = array<i64: 8, 128>}, {transform_indices = @transform_1, window_bounds = array<i64: 8, 128>}, {transform_indices = @transform_2, window_bounds = array<i64: 1, 8, 128>}]} {
    %c0 = arith.constant 0 : index
    %c0_0 = arith.constant 0 : index
    %0 = vector.load %arg2[%c0, %c0_0] : memref<8x128xf32, #tpu.memory_space<vmem>>, vector<8x128xf32>
    %c0_1 = arith.constant 0 : index
    %c0_2 = arith.constant 0 : index
    %1 = vector.load %arg3[%c0_1, %c0_2] : memref<8x128xf32, #tpu.memory_space<vmem>>, vector<8x128xf32>
    %cst = arith.constant 0.000000e+00 : f32
    %2 = vector.broadcast %cst : f32 to vector<8x128xf32>
    %3 = arith.subf %2, %1 : vector<8x128xf32>
    %4 = math.log %0 : vector<8x128xf32>
    %5 = arith.mulf %3, %4 : vector<8x128xf32>
    %cst_3 = arith.constant 1.000000e+00 : f32
    %6 = vector.broadcast %cst_3 : f32 to vector<8x128xf32>
    %7 = arith.subf %6, %1 : vector<8x128xf32>
    %cst_4 = arith.constant 1.000000e+00 : f32
    %8 = vector.broadcast %cst_4 : f32 to vector<8x128xf32>
    %9 = arith.subf %8, %0 : vector<8x128xf32>
    %10 = math.log %9 : vector<8x128xf32>
    %11 = arith.mulf %7, %10 : vector<8x128xf32>
    %12 = arith.subf %5, %11 : vector<8x128xf32>
    %c0_i32 = arith.constant 0 : i32
    %13 = arith.cmpi eq, %arg1, %c0_i32 : i32
    %14 = arith.extui %13 : i1 to i32
    %c0_i32_5 = arith.constant 0 : i32
    %15 = arith.cmpi ne, %14, %c0_i32_5 : i32
    scf.if %15 {
      %cst_9 = arith.constant 0.000000e+00 : f32
      %26 = vector.broadcast %cst_9 : f32 to vector<8x128xf32>
      %c0_10 = arith.constant 0 : index
      %c0_11 = arith.constant 0 : index
      %c0_12 = arith.constant 0 : index
      %27 = vector.load %arg4[%c0_10, %c0_11, %c0_12] : memref<1x8x128xf32, #tpu.memory_space<vmem>>, vector<1x8x128xf32>
      %28 = vector.shape_cast %27 : vector<1x8x128xf32> to vector<8x128xf32>
      %29 = vector.shape_cast %26 : vector<8x128xf32> to vector<1x8x128xf32>
      tpu.vector_store %arg4[%c0_10, %c0_11, %c0_12], %29 {strides = array<i32>} : memref<1x8x128xf32, #tpu.memory_space<vmem>>, vector<1x8x128xf32>,
    } else {
    }
    %c1_i32 = arith.constant 1 : i32
    %16 = arith.muli %arg0, %c1_i32 : i32
    %17 = arith.addi %16, %arg1 : i32
    %c8_i32 = arith.constant 8 : i32
    %18 = arith.muli %17, %c8_i32 : i32
    %c8_i32_6 = arith.constant 8 : i32
    %19 = arith.addi %18, %c8_i32_6 : i32
    %c7_i32 = arith.constant 7 : i32
    %20 = arith.cmpi sle, %19, %c7_i32 : i32
    %21 = arith.extui %20 : i1 to i32
    %c0_i32_7 = arith.constant 0 : i32
    %22 = arith.cmpi ne, %21, %c0_i32_7 : i32
    scf.if %22 {
      %c0_9 = arith.constant 0 : index
      %c0_10 = arith.constant 0 : index
      %c0_11 = arith.constant 0 : index
      %26 = vector.load %arg4[%c0_9, %c0_10, %c0_11] : memref<1x8x128xf32, #tpu.memory_space<vmem>>, vector<1x8x128xf32>
      %27 = vector.shape_cast %26 : vector<1x8x128xf32> to vector<8x128xf32>
      %28 = arith.addf %27, %12 : vector<8x128xf32>
      %c0_12 = arith.constant 0 : index
      %c0_13 = arith.constant 0 : index
      %c0_14 = arith.constant 0 : index
      %29 = vector.load %arg4[%c0_12, %c0_13, %c0_14] : memref<1x8x128xf32, #tpu.memory_space<vmem>>, vector<1x8x128xf32>
      %30 = vector.shape_cast %29 : vector<1x8x128xf32> to vector<8x128xf32>
      %31 = vector.shape_cast %28 : vector<8x128xf32> to vector<1x8x128xf32>
      tpu.vector_store %arg4[%c0_12, %c0_13, %c0_14], %31 {strides = array<i32>} : memref<1x8x128xf32, #tpu.memory_space<vmem>>, vector<1x8x128xf32>,
    } else {
    }
    %true = arith.constant true
    %23 = arith.xori %20, %true : i1
    %24 = arith.extui %23 : i1 to i32
    %c0_i32_8 = arith.constant 0 : i32
    %25 = arith.cmpi ne, %24, %c0_i32_8 : i32
    scf.if %25 {
      %26 = tpu.iota {dimensions = array<i32: 0>} : vector<8x128xi32>
      %c0_9 = arith.constant 0 : index
      %c0_10 = arith.constant 0 : index
      %c0_11 = arith.constant 0 : index
      %27 = vector.load %arg4[%c0_9, %c0_10, %c0_11] : memref<1x8x128xf32, #tpu.memory_space<vmem>>, vector<1x8x128xf32>
      %28 = vector.shape_cast %27 : vector<1x8x128xf32> to vector<8x128xf32>
      %c7_i32_12 = arith.constant 7 : i32
      %29 = arith.subi %c7_i32_12, %18 : i32
      %30 = vector.broadcast %29 : i32 to vector<8x128xi32>
      %31 = arith.cmpi slt, %26, %30 : vector<8x128xi32>
      %cst_13 = arith.constant 0.000000e+00 : f32
      %32 = vector.broadcast %cst_13 : f32 to vector<8x128xf32>
      %33 = arith.select %31, %12, %32 : vector<8x128xi1>, vector<8x128xf32>
      %34 = arith.addf %28, %33 : vector<8x128xf32>
      %c0_14 = arith.constant 0 : index
      %c0_15 = arith.constant 0 : index
      %c0_16 = arith.constant 0 : index
      %35 = vector.load %arg4[%c0_14, %c0_15, %c0_16] : memref<1x8x128xf32, #tpu.memory_space<vmem>>, vector<1x8x128xf32>
      %36 = vector.shape_cast %35 : vector<1x8x128xf32> to vector<8x128xf32>
      %37 = vector.shape_cast %34 : vector<8x128xf32> to vector<1x8x128xf32>
      tpu.vector_store %arg4[%c0_14, %c0_15, %c0_16], %37 {strides = array<i32>} : memref<1x8x128xf32, #tpu.memory_space<vmem>>, vector<1x8x128xf32>,
    } else {
    }
    return
  }
  func.func @transform_0(%arg0: i32, %arg1: i32) -> (i32, i32) {
    %c1_i32 = arith.constant 1 : i32
    %0 = arith.muli %arg0, %c1_i32 : i32
    %1 = arith.addi %0, %arg1 : i32
    %c0_i32 = arith.constant 0 : i32
    %c0_i32_0 = arith.constant 0 : i32
    return %1, %c0_i32 : i32, i32
  }
  func.func @transform_1(%arg0: i32, %arg1: i32) -> (i32, i32) {
    %c1_i32 = arith.constant 1 : i32
    %0 = arith.muli %arg0, %c1_i32 : i32
    %1 = arith.addi %0, %arg1 : i32
    %c0_i32 = arith.constant 0 : i32
    %c0_i32_0 = arith.constant 0 : i32
    return %1, %c0_i32 : i32, i32
  }
  func.func @transform_2(%arg0: i32, %arg1: i32) -> (i32, i32, i32) {
    %c0_i32 = arith.constant 0 : i32
    %c0_i32_0 = arith.constant 0 : i32
    %c0_i32_1 = arith.constant 0 : i32
    return %arg0, %c0_i32, %c0_i32_0 : i32, i32, i32
  }
}

</mosaic_0001>

<llo_original>
// kernel: tpu_custom_call.1
$region0: #{tpu_custom_call.1}
  #allocation0 [shape = 'u32[]', space=smem, size = 0x4, offset = 0x4, fixed_abs, tag = 'smem constant byte address 0x4 - core index']
  #allocation1 [shape = 'u32[144,128]{1,0:T(1,128)}', space=vmem, size = 0x12000, scoped, tag = 'internal scratch']
  %s0 = inlined_call_operand.hbm [shape: f32[7,128], index: 0, kind: input, shape index: {}]
  %s1 = inlined_call_operand.hbm [shape: f32[7,128], index: 1, kind: input, shape index: {}]
  %s2 = inlined_call_operand.hbm [shape: f32[1,8,128], index: 2, kind: output, shape index: {}]
  %s3 = sld [smem:[#allocation0]]
  $region38: #{tpu_custom_call.1} parent=0
    _
  %s5 = ssub.s32 1, %s3
  %s6 = scalar_select 0, %s5, %s3
  $region1: #{tpu_custom_call.1} parent=0
    #allocation2 [shape = 'u8[4096]{0}', space=vmem, size = 0x1000, scoped, tag = 'input window, operand 0, single buffered']
    #allocation3 [shape = 's32[1]{0}', space=sflag, size = 0x4, scoped, tag = 'scoped memory for tpu_custom_call.1']
    #allocation4 [shape = 's32[1]{0}', space=sflag, size = 0x4, scoped, tag = 'scoped memory for tpu_custom_call.1']
    #allocation5 [shape = 'u8[4096]{0}', space=vmem, size = 0x1000, scoped, tag = 'input window, operand 1, single buffered']
    #allocation6 [shape = 's32[1]{0}', space=sflag, size = 0x4, scoped, tag = 'scoped memory for tpu_custom_call.1']
    #allocation7 [shape = 'u8[4096]{0}', space=vmem, size = 0x1000, scoped, tag = 'output window, operand 0, single buffered']
    %7 = vsyncpa [#allocation3], 0
    %8 = vsyncpa [#allocation6], 0
    %9 = vsyncpa [#allocation4], 0
    // Predicated region
    $region2: #{tpu_custom_call.1} parent=1 // pred_check
      _
    $region3: #{tpu_custom_call.1} parent=1 // pred_check_branch
      %11 = sbr.rel (0) target = $region5
    $region4: #{tpu_custom_call.1} parent=1 // pred_region
      %s12 = sadd.s32 0, 0
      %s14 = ssub.s32 128, 128
      %15 = vsyncadd [#allocation3], %s14
      %s16 = smul.addr %s12, 128
      %s17 = scalar_lea.hbm %s0, %s16
      %s19 = sshll.u32 [#allocation2], 4
      %s20 = int_to_ptr.vmem [resolvable:$true] %s19
      %22 = dma.hbm_to_vmem [thread:$0]  %s17, 128, %s20, [#allocation3]
    $region5: #{tpu_custom_call.1} parent=1 // pred_fallthru
      _
    // Predicated region
    $region6: #{tpu_custom_call.1} parent=1 // pred_check
      _
    $region7: #{tpu_custom_call.1} parent=1 // pred_check_branch
      %24 = sbr.rel (0) target = $region9
    $region8: #{tpu_custom_call.1} parent=1 // pred_region
      %s25 = sadd.s32 0, 0
      %s27 = ssub.s32 128, 128
      %28 = vsyncadd [#allocation6], %s27
      %s29 = smul.addr %s25, 128
      %s30 = scalar_lea.hbm %s1, %s29
      %s32 = sshll.u32 [#allocation5], 4
      %s33 = int_to_ptr.vmem [resolvable:$true] %s32
      %35 = dma.hbm_to_vmem [thread:$0]  %s30, 128, %s33, [#allocation6]
    $region9: #{tpu_custom_call.1} parent=1 // pred_fallthru
      _
    // Predicated region
    $region10: #{tpu_custom_call.1} parent=1 // pred_check
      _
    $region11: #{tpu_custom_call.1} parent=1 // pred_check_branch
      %37 = sbr.rel (0) target = $region13
    $region12: #{tpu_custom_call.1} parent=1 // pred_region
      %38 = dma.done [#allocation3], 128
    $region13: #{tpu_custom_call.1} parent=1 // pred_fallthru
      _
    // Predicated region
    $region14: #{tpu_custom_call.1} parent=1 // pred_check
      _
    $region15: #{tpu_custom_call.1} parent=1 // pred_check_branch
      %40 = sbr.rel (0) target = $region17
    $region16: #{tpu_custom_call.1} parent=1 // pred_region
      %41 = dma.done [#allocation6], 128
    $region17: #{tpu_custom_call.1} parent=1 // pred_fallthru
      _
    %s42 = sadd.s32 0, 0
    %s43 = sadd.s32 0, 0
    %v44 = vld [vmem:[#allocation2] sm:$0xff]
    %v45 = vld [vmem:[#allocation5] sm:$0xff]
    %v46 = vsub.f32 0.0, %v45
    %v47 = vlog2.pop %v44
    %v48 = vmul.f32 %v47, 0.6931472
    %v49 = vmul.f32 %v46, %v48
    %v50 = vsub.f32 1.0, %v45
    %v51 = vsub.f32 1.0, %v44
    %v52 = vlog2.pop %v51
    %v53 = vmul.f32 %v52, 0.6931472
    %v54 = vmul.f32 %v50, %v53
    %v55 = vsub.f32 %v49, %v54
    %p56 = scmp.eq.s32.totalorder 0, 0
    // Predicated region
    $region18: #{tpu_custom_call.1} parent=1 // pred_check
      %p57 = pneg %p56
    $region19: #{tpu_custom_call.1} parent=1 // pred_check_branch
      %59 = sbr.rel (%p57) target = $region21
    $region20: #{tpu_custom_call.1} parent=1 // pred_region
      %60 = vst [vmem:[#allocation7] sm:$0xff] 0.0
    $region21: #{tpu_custom_call.1} parent=1 // pred_fallthru
      _
    %s61 = sadd.s32 0, 0
    %s62 = smul.u32 %s61, 8
    %s63 = sadd.s32 %s62, 8
    %p64 = scmp.le.s32.totalorder %s63, 7
    // Predicated region
    $region22: #{tpu_custom_call.1} parent=1 // pred_check
      %p65 = pneg %p64
    $region23: #{tpu_custom_call.1} parent=1 // pred_check_branch
      %67 = sbr.rel (%p65) target = $region25
    $region24: #{tpu_custom_call.1} parent=1 // pred_region
      %v68 = vld [vmem:[#allocation7] sm:$0xff]
      %v69 = vadd.f32 %v68, %v55
      %70 = vst [vmem:[#allocation7] sm:$0xff] %v69
    $region25: #{tpu_custom_call.1} parent=1 // pred_fallthru
      _
    %p71 = scmp.gt.s32.totalorder %s63, 7
    // Predicated region
    $region26: #{tpu_custom_call.1} parent=1 // pred_check
      %p72 = pneg %p71
    $region27: #{tpu_custom_call.1} parent=1 // pred_check_branch
      %74 = sbr.rel (%p72) target = $region29
    $region28: #{tpu_custom_call.1} parent=1 // pred_region
      %v75 = vlaneseq
      %v76 = vshrl.u32 %v75, 7
      %v77 = vld [vmem:[#allocation7] sm:$0xff]
      %s78 = ssub.s32 7, %s62
      %v79 = vstv %s78
      %vm80 = vcmp.lt.s32.totalorder %v76, %v79
      %v81 = vsel %vm80, %v55, 0.0
      %v82 = vadd.f32 %v77, %v81
      %83 = vst [vmem:[#allocation7] sm:$0xff] %v82
    $region29: #{tpu_custom_call.1} parent=1 // pred_fallthru
      _
    // Predicated region
    $region30: #{tpu_custom_call.1} parent=1 // pred_check
      _
    $region31: #{tpu_custom_call.1} parent=1 // pred_check_branch
      %85 = sbr.rel (0) target = $region33
    $region32: #{tpu_custom_call.1} parent=1 // pred_region
      %s87 = ssub.s32 128, 128
      %88 = vsyncadd [#allocation4], %s87
      %s90 = sshll.u32 [#allocation7], 4
      %s91 = int_to_ptr.vmem [resolvable:$true] %s90
      %93 = dma.vmem_to_hbm [thread:$0]  %s91, 128, %s2, [#allocation4]
    $region33: #{tpu_custom_call.1} parent=1 // pred_fallthru
      _
    // Predicated region
    $region34: #{tpu_custom_call.1} parent=1 // pred_check
      _
    $region35: #{tpu_custom_call.1} parent=1 // pred_check_branch
      %95 = sbr.rel (0) target = $region37
    $region36: #{tpu_custom_call.1} parent=1 // pred_region
      %96 = dma.done [#allocation4], 128
    $region37: #{tpu_custom_call.1} parent=1 // pred_fallthru
      _
    %97 = vsyncpa [#allocation3], 1
    %98 = vsyncpa [#allocation6], 1
    %99 = vsyncpa [#allocation4], 1

</llo_original>
